<compile_context>
chip_gen: v7x
topology: tpu7x:2x2x1
jax: 0.10.0
libtpu: 0.0.40
codegen_flags: <defaults>
</compile_context>

<pallas_src>
import functools
import math

import jax
import jax.numpy as jnp
from jax import lax
from jax.experimental import pallas as pl
from jax.experimental.pallas import tpu as pltpu


def _weighted_loss_kernel(pred_ref, targ_ref, w_ref, a0c_ref, out_ref, acc_ref,
                          *, inv_n_w, inv_n_a0, tile_b, rows_total,
                          steps_per_core, needs_mask):
    i = pl.program_id(1)

    # --- init accumulator at the start of each core's reduction ------------
    @pl.when(i == 0)
    def _():
        acc_ref[...] = jnp.zeros_like(acc_ref)

    # --- per-tile work ------------------------------------------------------
    diff = pred_ref[...].astype(jnp.float32) - targ_ref[...].astype(jnp.float32)
    loss = diff * diff                                     # [tile_b, lanes]

    if needs_mask:
        # Global block index for this (core, step); rows at/after rows_total
        # are garbage (partial edge block or clamped dummy step) -> zero them.
        bi = pl.program_id(0) * steps_per_core + i
        valid = rows_total - bi * tile_b
        row_idx = lax.broadcasted_iota(jnp.int32, (tile_b, 1), 0)
        loss = jnp.where(row_idx < valid, loss, 0.0)

    # Unweighted per-lane (column) sum over this tile's batch rows.
    acc_ref[...] += jnp.sum(loss, axis=0, keepdims=True)   # [1, lanes]

    # --- finalize on this core's last step -----------------------------------
    @pl.when(i == pl.num_programs(1) - 1)
    def _():
        wl = jnp.sum(acc_ref[...] * w_ref[...]) * inv_n_w
        a0 = jnp.sum(acc_ref[...] * a0c_ref[...]) * inv_n_a0
        lane = lax.broadcasted_iota(jnp.int32, out_ref.shape, 2)
        # lane 0 = weighted_loss partial, lane 1 = a0_loss partial (lane-dense store).
        out_ref[...] = jnp.where(lane == 0, wl, jnp.where(lane == 1, a0, 0.0))


def weighted_loss(pred, targ, weights, action_dim: int):
    """Returns (weighted_loss, {'a0_loss': a0_loss}) matching the torch module
    with an L2 `_loss` (squared error)."""
    B, H, T = pred.shape
    assert targ.shape == (B, H, T)
    assert weights.shape == (H, T)
    # The a0 lane mask maps lanes [0, action_dim) to (h=0, t<action_dim) only
    # when action_dim <= T under the h*T + t flattening.
    assert action_dim <= T, "action_dim must be <= transition_dim"
    HT = H * T

    # ---- lane-dense layout plumbing (wrapper-side, no extra compute) ------
    # If HT is not a 128-multiple, pack k samples per vector row (free reshape)
    # so the lane width is 128-aligned; otherwise k = 1.
    need = 128 // math.gcd(HT, 128)
    k = need if (need > 1 and B % need == 0) else 1
    rows = B // k
    lanes = k * HT

    pred2 = pred.reshape(rows, lanes)
    targ2 = targ.reshape(rows, lanes)

    w_flat = weights.reshape(HT).astype(jnp.float32)
    w_row = jnp.tile(w_flat.reshape(1, HT), (1, k))        # (1, lanes)

    # a0 coefficient: 1/weights[0, :action_dim] on lanes [m*HT, m*HT+action_dim)
    # for each packed sample m, zero elsewhere.
    lane_idx = jnp.arange(HT)
    a0_mask = lane_idx < action_dim
    safe_w = jnp.where(a0_mask, w_flat, 1.0)                # avoid 1/0 off-mask
    a0_row = jnp.tile((a0_mask.astype(jnp.float32) / safe_w).reshape(1, HT), (1, k))

    # ---- tile selection (double-buffered inputs must fit scoped VMEM) -----
    try:
        vmem_cap = int(pltpu.get_tpu_info().vmem_capacity_bytes)
    except Exception:                                       # pragma: no cover
        vmem_cap = 64 * 1024 * 1024                         # v7x per-TC size (conservative)
    vmem_limit = min((vmem_cap * 3) // 4, 96 * 1024 * 1024)
    budget = vmem_limit // 2                                # 2 inputs x 2 buffers

    itemsize = pred.dtype.itemsize
    tile_b = budget // (4 * lanes * itemsize)
    tile_b = max(8, (tile_b // 8) * 8)
    if tile_b >= rows:
        tile_b = rows                                       # full dim -> no (8,) issue

    total_blocks = -(-rows // tile_b)                       # cdiv, partial edge block OK
    n_splits = 2 if total_blocks >= 2 else 1                # 2 TCs on v7x; free elsewhere
    steps_per_core = -(-total_blocks // n_splits)
    has_dummy = (steps_per_core * n_splits) != total_blocks
    needs_mask = has_dummy or (rows % tile_b != 0)

    if has_dummy:
        # Clamp dummy trailing steps onto the last valid block (masked to zero
        # in-kernel), so DMAs never go out of bounds.
        def data_map(c, i):
            return (jnp.minimum(c * steps_per_core + i, total_blocks - 1), 0)
    else:
        def data_map(c, i):
            return (c * steps_per_core + i, 0)

    inv_n_w = 1.0 / float(B * H * T)
    # TODO(synk): action_dim == 0 returns a0_loss = 0; torch's mean over an
    # empty slice would be NaN.
    inv_n_a0 = 1.0 / float(B * max(action_dim, 1))

    kernel = functools.partial(
        _weighted_loss_kernel,
        inv_n_w=inv_n_w, inv_n_a0=inv_n_a0,
        tile_b=tile_b, rows_total=rows,
        steps_per_core=steps_per_core, needs_mask=needs_mask)

    cost = pl.CostEstimate(
        flops=4 * B * HT,
        transcendentals=0,
        bytes_accessed=2 * B * HT * itemsize + 2 * lanes * 4 + n_splits * 8 * 128 * 4,
    )

    out = pl.pallas_call(
        kernel,
        out_shape=jax.ShapeDtypeStruct((n_splits, 8, 128), jnp.float32),
        grid_spec=pltpu.PrefetchScalarGridSpec(
            num_scalar_prefetch=0,
            grid=(n_splits, steps_per_core),
            in_specs=[
                pl.BlockSpec((tile_b, lanes), data_map),            # pred rows
                pl.BlockSpec((tile_b, lanes), data_map),            # targ rows
                pl.BlockSpec((1, lanes), lambda c, i: (0, 0)),      # weights (resident)
                pl.BlockSpec((1, lanes), lambda c, i: (0, 0)),      # a0 coeff (resident)
            ],
            out_specs=pl.BlockSpec((1, 8, 128), lambda c, i: (c, 0, 0)),
            scratch_shapes=[
                pltpu.VMEM((1, lanes), jnp.float32),                # column-sum accumulator
            ],
        ),
        compiler_params=pltpu.CompilerParams(
            dimension_semantics=("parallel", "arbitrary"),
            vmem_limit_bytes=int(vmem_limit),
        ),
        cost_estimate=cost,
    )(pred2, targ2, w_row, a0_row)

    # Sum the per-core partial rows (tiny (n_splits, 2) reduce in the wrapper).
    partials = jnp.sum(out[:, 0, :2], axis=0)
    return partials[0], {"a0_loss": partials[1]}


def _reference(pred, targ, weights, action_dim):
    loss = (pred.astype(jnp.float32) - targ.astype(jnp.float32)) ** 2
    weighted = jnp.mean(loss * weights[None, :, :].astype(jnp.float32))
    a0 = jnp.mean(loss[:, 0, :action_dim] / weights[0, :action_dim].astype(jnp.float32))
    return weighted, a0


if __name__ == "__main__":
    # Small shapes consistent with [batch_size x horizon x transition_dim].
    B, H, T = 2, 8, 32
    action_dim = 4

    key = jax.random.PRNGKey(0)
    k_pred, k_targ = jax.random.split(key)
    pred = jax.random.normal(k_pred, (B, H, T), dtype=jnp.float32)
    targ = jax.random.normal(k_targ, (B, H, T), dtype=jnp.float32)

    # Deterministic, strictly positive per-(horizon, dim) weights
    # (mimics the registered buffer built in the diffuser setup).
    weights = 0.5 + 0.05 * jnp.arange(H * T, dtype=jnp.float32).reshape(H, T)

    wloss, aux = weighted_loss(pred, targ, weights, action_dim)
    jax.block_until_ready((wloss, aux["a0_loss"]))

    # Sanity check against a pure-JAX reference of the torch semantics.
    ref_w, ref_a0 = _reference(pred, targ, weights, action_dim)
    assert jnp.allclose(wloss, ref_w, rtol=1e-5, atol=1e-5), (wloss, ref_w)
    assert jnp.allclose(aux["a0_loss"], ref_a0, rtol=1e-5, atol=1e-5), (aux["a0_loss"], ref_a0)

    print("KERNEL_OK")
</pallas_src>

<mosaic_0001>
module attributes {stable_mosaic.version = 11 : i64} {
  func.func @_weighted_loss_kernel(%arg0: i32, %arg1: i32, %arg2: memref<2x256xf32, #tpu.memory_space<vmem>>, %arg3: memref<2x256xf32, #tpu.memory_space<vmem>>, %arg4: memref<1x256xf32, #tpu.memory_space<vmem>>, %arg5: memref<1x256xf32, #tpu.memory_space<vmem>>, %arg6: memref<1x8x128xf32, #tpu.memory_space<vmem>>, %arg7: memref<1x256xf32, #tpu.memory_space<vmem>>) attributes {dimension_semantics = [#tpu.dimension_semantics<parallel>, #tpu.dimension_semantics<arbitrary>], iteration_bounds = array<i64: 1, 1>, scalar_prefetch = 0 : i64, scratch_operands = 1 : i64, tpu.core_type = #tpu.core_type<tc>, window_params = [{transform_indices = @transform_0, window_bounds = array<i64: 2, 256>}, {transform_indices = @transform_1, window_bounds = array<i64: 2, 256>}, {pipeline_mode = #tpu.pipeline_mode<synchronous>, transform_indices = @transform_2, window_bounds = array<i64: 1, 256>}, {pipeline_mode = #tpu.pipeline_mode<synchronous>, transform_indices = @transform_3, window_bounds = array<i64: 1, 256>}, {transform_indices = @transform_4, window_bounds = array<i64: 1, 8, 128>}]} {
    %c0_i32 = arith.constant 0 : i32
    %0 = arith.cmpi eq, %arg1, %c0_i32 : i32
    %1 = arith.extui %0 : i1 to i32
    %c0_i32_0 = arith.constant 0 : i32
    %2 = arith.cmpi ne, %1, %c0_i32_0 : i32
    scf.if %2 {
      %cst_10 = arith.constant 0.000000e+00 : f32
      %15 = vector.broadcast %cst_10 : f32 to vector<1x256xf32>
      %c0_11 = arith.constant 0 : index
      %c0_12 = arith.constant 0 : index
      %16 = vector.load %arg7[%c0_11, %c0_12] : memref<1x256xf32, #tpu.memory_space<vmem>>, vector<1x256xf32>
      tpu.vector_store %arg7[%c0_11, %c0_12], %15 {strides = array<i32>} : memref<1x256xf32, #tpu.memory_space<vmem>>, vector<1x256xf32>,
    } else {
    }
    %c0 = arith.constant 0 : index
    %c0_1 = arith.constant 0 : index
    %3 = vector.load %arg2[%c0, %c0_1] : memref<2x256xf32, #tpu.memory_space<vmem>>, vector<2x256xf32>
    %c0_2 = arith.constant 0 : index
    %c0_3 = arith.constant 0 : index
    %4 = vector.load %arg3[%c0_2, %c0_3] : memref<2x256xf32, #tpu.memory_space<vmem>>, vector<2x256xf32>
    %5 = arith.subf %3, %4 : vector<2x256xf32>
    %6 = arith.mulf %5, %5 : vector<2x256xf32>
    %c0_4 = arith.constant 0 : index
    %c0_5 = arith.constant 0 : index
    %7 = vector.load %arg7[%c0_4, %c0_5] : memref<1x256xf32, #tpu.memory_space<vmem>>, vector<1x256xf32>
    %cst = arith.constant dense<0.000000e+00> : vector<256xf32>
    %8 = vector.multi_reduction <add>, %6, %cst [0] : vector<2x256xf32> to vector<256xf32>
    %9 = vector.shape_cast %8 : vector<256xf32> to vector<1x256xf32>
    %10 = arith.addf %7, %9 : vector<1x256xf32>
    %c0_6 = arith.constant 0 : index
    %c0_7 = arith.constant 0 : index
    %11 = vector.load %arg7[%c0_6, %c0_7] : memref<1x256xf32, #tpu.memory_space<vmem>>, vector<1x256xf32>
    tpu.vector_store %arg7[%c0_6, %c0_7], %10 {strides = array<i32>} : memref<1x256xf32, #tpu.memory_space<vmem>>, vector<1x256xf32>,
    %c0_i32_8 = arith.constant 0 : i32
    %12 = arith.cmpi eq, %arg1, %c0_i32_8 : i32
    %13 = arith.extui %12 : i1 to i32
    %c0_i32_9 = arith.constant 0 : i32
    %14 = arith.cmpi ne, %13, %c0_i32_9 : i32
    scf.if %14 {
      %c0_10 = arith.constant 0 : index
      %c0_11 = arith.constant 0 : index
      %15 = vector.load %arg7[%c0_10, %c0_11] : memref<1x256xf32, #tpu.memory_space<vmem>>, vector<1x256xf32>
      %c0_12 = arith.constant 0 : index
      %c0_13 = arith.constant 0 : index
      %16 = vector.load %arg4[%c0_12, %c0_13] : memref<1x256xf32, #tpu.memory_space<vmem>>, vector<1x256xf32>
      %17 = arith.mulf %15, %16 : vector<1x256xf32>
      %18 = vector.shape_cast %17 : vector<1x256xf32> to vector<1x1x256xf32>
      %cst_14 = arith.constant dense<0.000000e+00> : vector<1xf32>
      %19 = vector.multi_reduction <add>, %18, %cst_14 [1, 2] : vector<1x1x256xf32> to vector<1xf32>
      %20 = vector.shape_cast %19 : vector<1xf32> to vector<1x1x1xf32>
      %21 = vector.extract %20[0, 0, 0] : f32 from vector<1x1x1xf32>
      %cst_15 = arith.constant 0.001953125 : f32
      %22 = arith.mulf %21, %cst_15 : f32
      %c0_16 = arith.constant 0 : index
      %c0_17 = arith.constant 0 : index
      %23 = vector.load %arg7[%c0_16, %c0_17] : memref<1x256xf32, #tpu.memory_space<vmem>>, vector<1x256xf32>
      %c0_18 = arith.constant 0 : index
      %c0_19 = arith.constant 0 : index
      %24 = vector.load %arg5[%c0_18, %c0_19] : memref<1x256xf32, #tpu.memory_space<vmem>>, vector<1x256xf32>
      %25 = arith.mulf %23, %24 : vector<1x256xf32>
      %26 = vector.shape_cast %25 : vector<1x256xf32> to vector<1x1x256xf32>
      %cst_20 = arith.constant dense<0.000000e+00> : vector<1xf32>
      %27 = vector.multi_reduction <add>, %26, %cst_20 [1, 2] : vector<1x1x256xf32> to vector<1xf32>
      %28 = vector.shape_cast %27 : vector<1xf32> to vector<1x1x1xf32>
      %29 = vector.extract %28[0, 0, 0] : f32 from vector<1x1x1xf32>
      %cst_21 = arith.constant 1.250000e-01 : f32
      %30 = arith.mulf %29, %cst_21 : f32
      %31 = tpu.iota {dimensions = array<i32: 2>} : vector<1x8x128xi32>
      %c0_i32_22 = arith.constant 0 : i32
      %32 = vector.broadcast %c0_i32_22 : i32 to vector<1x8x128xi32>
      %33 = arith.cmpi eq, %31, %32 : vector<1x8x128xi32>
      %c1_i32 = arith.constant 1 : i32
      %34 = vector.broadcast %c1_i32 : i32 to vector<1x8x128xi32>
      %35 = arith.cmpi eq, %31, %34 : vector<1x8x128xi32>
      %cst_23 = arith.constant 0.000000e+00 : f32
      %36 = vector.broadcast %30 : f32 to vector<1x8x128xf32>
      %37 = vector.broadcast %cst_23 : f32 to vector<1x8x128xf32>
      %38 = arith.select %35, %36, %37 : vector<1x8x128xi1>, vector<1x8x128xf32>
      %39 = vector.broadcast %22 : f32 to vector<1x8x128xf32>
      %40 = arith.select %33, %39, %38 : vector<1x8x128xi1>, vector<1x8x128xf32>
      %c0_24 = arith.constant 0 : index
      %c0_25 = arith.constant 0 : index
      %c0_26 = arith.constant 0 : index
      %41 = vector.load %arg6[%c0_24, %c0_25, %c0_26] : memref<1x8x128xf32, #tpu.memory_space<vmem>>, vector<1x8x128xf32>
      tpu.vector_store %arg6[%c0_24, %c0_25, %c0_26], %40 {strides = array<i32>} : memref<1x8x128xf32, #tpu.memory_space<vmem>>, vector<1x8x128xf32>,
    } else {
    }
    return
  }
  func.func @transform_0(%arg0: i32, %arg1: i32) -> (i32, i32) {
    %c1_i32 = arith.constant 1 : i32
    %0 = arith.muli %arg0, %c1_i32 : i32
    %1 = arith.addi %0, %arg1 : i32
    %c0_i32 = arith.constant 0 : i32
    %c0_i32_0 = arith.constant 0 : i32
    return %1, %c0_i32 : i32, i32
  }
  func.func @transform_1(%arg0: i32, %arg1: i32) -> (i32, i32) {
    %c1_i32 = arith.constant 1 : i32
    %0 = arith.muli %arg0, %c1_i32 : i32
    %1 = arith.addi %0, %arg1 : i32
    %c0_i32 = arith.constant 0 : i32
    %c0_i32_0 = arith.constant 0 : i32
    return %1, %c0_i32 : i32, i32
  }
  func.func @transform_2(%arg0: i32, %arg1: i32) -> (i32, i32) {
    %c0_i32 = arith.constant 0 : i32
    %c0_i32_0 = arith.constant 0 : i32
    %c0_i32_1 = arith.constant 0 : i32
    return %c0_i32, %c0_i32_0 : i32, i32
  }
  func.func @transform_3(%arg0: i32, %arg1: i32) -> (i32, i32) {
    %c0_i32 = arith.constant 0 : i32
    %c0_i32_0 = arith.constant 0 : i32
    %c0_i32_1 = arith.constant 0 : i32
    return %c0_i32, %c0_i32_0 : i32, i32
  }
  func.func @transform_4(%arg0: i32, %arg1: i32) -> (i32, i32, i32) {
    %c0_i32 = arith.constant 0 : i32
    %c0_i32_0 = arith.constant 0 : i32
    %c0_i32_1 = arith.constant 0 : i32
    return %arg0, %c0_i32, %c0_i32_0 : i32, i32, i32
  }
}

</mosaic_0001>

<llo_original>
// kernel: tpu_custom_call.1
$region0: #{tpu_custom_call.1}
  #allocation0 [shape = 'u32[]', space=smem, size = 0x4, offset = 0x4, fixed_abs, tag = 'smem constant byte address 0x4 - core index']
  #allocation1 [shape = 'u32[144,128]{1,0:T(1,128)}', space=vmem, size = 0x12000, scoped, tag = 'internal scratch']
  #allocation2 [shape = 'f32[1,256]{1,0:T(1,128)}', space=vmem, size = 0x400, scoped, tag = 'scratch operand']
  %s0 = inlined_call_operand.hbm [shape: f32[2,256], index: 0, kind: input, shape index: {}]
  %s1 = inlined_call_operand.hbm [shape: f32[2,256], index: 1, kind: input, shape index: {}]
  %s2 = inlined_call_operand.vmem [shape: f32[1,256], index: 2, kind: input, shape index: {}]
  %s3 = inlined_call_operand.vmem [shape: f32[1,256], index: 3, kind: input, shape index: {}]
  %s4 = inlined_call_operand.hbm [shape: f32[1,8,128], index: 4, kind: output, shape index: {}]
  %s5 = sld [smem:[#allocation0]]
  $region42: #{tpu_custom_call.1} parent=0
    _
  %s7 = ssub.s32 1, %s5
  %s8 = scalar_select 0, %s7, %s5
  $region1: #{tpu_custom_call.1} parent=0
    #allocation3 [shape = 'u8[2048]{0}', space=vmem, size = 0x800, scoped, tag = 'input window, operand 0, single buffered']
    #allocation4 [shape = 's32[1]{0}', space=sflag, size = 0x4, scoped, tag = 'scoped memory for tpu_custom_call.1']
    #allocation5 [shape = 's32[1]{0}', space=sflag, size = 0x4, scoped, tag = 'scoped memory for tpu_custom_call.1']
    #allocation6 [shape = 'u8[2048]{0}', space=vmem, size = 0x800, scoped, tag = 'input window, operand 1, single buffered']
    #allocation7 [shape = 's32[1]{0}', space=sflag, size = 0x4, scoped, tag = 'scoped memory for tpu_custom_call.1']
    #allocation8 [shape = 'u8[4096]{0}', space=vmem, size = 0x1000, scoped, tag = 'output window, operand 0, single buffered']
    %9 = vsyncpa [#allocation4], 0
    %10 = vsyncpa [#allocation7], 0
    %11 = vsyncpa [#allocation5], 0
    // Predicated region
    $region2: #{tpu_custom_call.1} parent=1 // pred_check
      _
    $region3: #{tpu_custom_call.1} parent=1 // pred_check_branch
      %13 = sbr.rel (0) target = $region5
    $region4: #{tpu_custom_call.1} parent=1 // pred_region
      %s14 = sadd.s32 0, 0
      %s16 = ssub.s32 64, 64
      %17 = vsyncadd [#allocation4], %s16
      %s18 = smul.addr %s14, 2
      %s19 = smul.addr %s18, 32
      %s20 = scalar_lea.hbm %s0, %s19
      %s22 = sshll.u32 [#allocation3], 4
      %s23 = int_to_ptr.vmem [resolvable:$true] %s22
      %25 = dma.hbm_to_vmem [thread:$0]  %s20, 64, %s23, [#allocation4]
    $region5: #{tpu_custom_call.1} parent=1 // pred_fallthru
      _
    // Predicated region
    $region6: #{tpu_custom_call.1} parent=1 // pred_check
      _
    $region7: #{tpu_custom_call.1} parent=1 // pred_check_branch
      %27 = sbr.rel (0) target = $region9
    $region8: #{tpu_custom_call.1} parent=1 // pred_region
      %s28 = sadd.s32 0, 0
      %s30 = ssub.s32 64, 64
      %31 = vsyncadd [#allocation7], %s30
      %s32 = smul.addr %s28, 2
      %s33 = smul.addr %s32, 32
      %s34 = scalar_lea.hbm %s1, %s33
      %s36 = sshll.u32 [#allocation6], 4
      %s37 = int_to_ptr.vmem [resolvable:$true] %s36
      %39 = dma.hbm_to_vmem [thread:$0]  %s34, 64, %s37, [#allocation7]
    $region9: #{tpu_custom_call.1} parent=1 // pred_fallthru
      _
    // Predicated region
    $region10: #{tpu_custom_call.1} parent=1 // pred_check
      _
    $region11: #{tpu_custom_call.1} parent=1 // pred_check_branch
      %41 = sbr.rel (0) target = $region13
    $region12: #{tpu_custom_call.1} parent=1 // pred_region
      _
    $region13: #{tpu_custom_call.1} parent=1 // pred_fallthru
      _
    // Predicated region
    $region14: #{tpu_custom_call.1} parent=1 // pred_check
      _
    $region15: #{tpu_custom_call.1} parent=1 // pred_check_branch
      %43 = sbr.rel (0) target = $region17
    $region16: #{tpu_custom_call.1} parent=1 // pred_region
      _
    $region17: #{tpu_custom_call.1} parent=1 // pred_fallthru
      _
    // Predicated region
    $region18: #{tpu_custom_call.1} parent=1 // pred_check
      _
    $region19: #{tpu_custom_call.1} parent=1 // pred_check_branch
      %45 = sbr.rel (0) target = $region21
    $region20: #{tpu_custom_call.1} parent=1 // pred_region
      %46 = dma.done [#allocation4], 64
    $region21: #{tpu_custom_call.1} parent=1 // pred_fallthru
      _
    // Predicated region
    $region22: #{tpu_custom_call.1} parent=1 // pred_check
      _
    $region23: #{tpu_custom_call.1} parent=1 // pred_check_branch
      %48 = sbr.rel (0) target = $region25
    $region24: #{tpu_custom_call.1} parent=1 // pred_region
      %49 = dma.done [#allocation7], 64
    $region25: #{tpu_custom_call.1} parent=1 // pred_fallthru
      _
    %s50 = sadd.s32 0, 0
    %s51 = sadd.s32 0, 0
    %p52 = scmp.eq.s32.totalorder 0, 0
    // Predicated region
    $region26: #{tpu_custom_call.1} parent=1 // pred_check
      %p53 = pneg %p52
    $region27: #{tpu_custom_call.1} parent=1 // pred_check_branch
      %55 = sbr.rel (%p53) target = $region29
    $region28: #{tpu_custom_call.1} parent=1 // pred_region
      %v56 = vlaneseq
      %vm57 = vcmp.ge.s32.totalorder %v56, 0
      %vm58 = vcmp.lt.s32.totalorder %v56, 256
      %vm59 = vmand %vm57, %vm58
      %60 = vst.msk [vmem:[#allocation2] sm:$0x3] %vm59, 0.0
    $region29: #{tpu_custom_call.1} parent=1 // pred_fallthru
      _
    %v61 = vld [vmem:[#allocation3] sm:$0xf]
    %v62 = vld [vmem:[#allocation6] sm:$0xf]
    %v63 = vsub.f32 %v61, %v62
    %v64 = vmul.f32 %v63, %v63
    %v65 = vld [vmem:[#allocation2] sm:$0x3]
    %v68 = vunpack.c.l.s4 1983009808
    %v69 = vunpack.c.0.s8 %v68
    %v70 = vlaneseq
    %v71 = vshrl.u32 %v70, 7
    %v72 = vsub.s32 %v69, %v71
    %v73 = vrot.slane %v64, %v72
    %v74 = vcombine.high %v73, %v73
    %vm77 = vcmask 1041408
    %v78 = vsel %vm77, %v73, 0.0
    %v79 = vrot.slane %v78, 4
    %v80 = vadd.f32 %v78, %v79
    %v81 = vrot.slane %v80, 2
    %v82 = vadd.f32 %v80, %v81
    %v83 = vrot.slane %v82, 1
    %v84 = vadd.f32 %v82, %v83
    %v85 = vsel %vm77, %v74, 0.0
    %v86 = vrot.slane %v85, 4
    %v87 = vadd.f32 %v85, %v86
    %v88 = vrot.slane %v87, 2
    %v89 = vadd.f32 %v87, %v88
    %v90 = vrot.slane %v89, 1
    %v91 = vadd.f32 %v89, %v90
    %v94 = vcombine.low %v84, %v91
    %v96 = vunpack.c.l.s4 1966171168
    %v97 = vunpack.c.0.s8 %v96
    %v98 = vlaneseq
    %v99 = vshrl.u32 %v98, 7
    %v100 = vsub.s32 %v97, %v99
    %v101 = vrot.slane %v94, %v100
    %v103 = vunpack.c.l.s4 1966171168
    %v104 = vunpack.c.0.s8 %v103
    %v105 = vlaneseq
    %v106 = vshrl.u32 %v105, 7
    %v107 = vsub.s32 %v104, %v106
    %v108 = vrot.slane %v101, %v107
    %v110 = vadd.f32 %v65, %v108
    %v111 = vlaneseq
    %vm112 = vcmp.ge.s32.totalorder %v111, 0
    %vm113 = vcmp.lt.s32.totalorder %v111, 256
    %vm114 = vmand %vm112, %vm113
    %115 = vst.msk [vmem:[#allocation2] sm:$0x3] %vm114, %v110
    // Predicated region
    $region30: #{tpu_custom_call.1} parent=1 // pred_check
      %p116 = pneg %p52
    $region31: #{tpu_custom_call.1} parent=1 // pred_check_branch
      %118 = sbr.rel (%p116) target = $region33
    $region32: #{tpu_custom_call.1} parent=1 // pred_region
      %v119 = vld [vmem:[#allocation2] sm:$0x3]
      %v120 = vld [vmem:[%s2] sm:$0x3]
      %v121 = vmul.f32 %v119, %v120
      %v123 = vlaneseq
      %v124 = vshrl.u32 %v123, 7
      %v125 = vsub.s32 0, %v124
      %v126 = vrot.slane %v121, %v125
      %v127 = vlaneseq
      %v128 = vshrl.u32 %v127, 7
      %v129 = vsub.s32 1, %v128
      %v130 = vrot.slane %v121, %v129
      %vm133 = vcmask 1040384
      %v134 = vsel %vm133, %v126, 0.0
      %v135 = vsel %vm133, %v130, 0.0
      %v136 = vadd.f32 %v134, %v135
      %137 = vadd.xlane.f32.xlu0 %v136
      %v138 = vpop.xlane.xlu0 %137
      %v139 = vrot.slane %v138, 4
      %v140 = vadd.f32 %v138, %v139
      %v141 = vrot.slane %v140, 2
      %v142 = vadd.f32 %v140, %v141
      %v143 = vrot.slane %v142, 1
      %v144 = vadd.f32 %v142, %v143
      %s145 = vtos %v144
      %s146 = smul.f32 %s145, 0.001953125
      %v147 = vld [vmem:[%s3] sm:$0x3]
      %v148 = vmul.f32 %v119, %v147
      %v150 = vlaneseq
      %v151 = vshrl.u32 %v150, 7
      %v152 = vsub.s32 0, %v151
      %v153 = vrot.slane %v148, %v152
      %v154 = vlaneseq
      %v155 = vshrl.u32 %v154, 7
      %v156 = vsub.s32 1, %v155
      %v157 = vrot.slane %v148, %v156
      %v160 = vsel %vm133, %v153, 0.0
      %v161 = vsel %vm133, %v157, 0.0
      %v162 = vadd.f32 %v160, %v161
      %163 = vadd.xlane.f32.xlu0 %v162
      %v164 = vpop.xlane.xlu0 %163
      %v165 = vrot.slane %v164, 4
      %v166 = vadd.f32 %v164, %v165
      %v167 = vrot.slane %v166, 2
      %v168 = vadd.f32 %v166, %v167
      %v169 = vrot.slane %v168, 1
      %v170 = vadd.f32 %v168, %v169
      %s171 = vtos %v170
      %s172 = smul.f32 %s171, 0.125
      %v173 = vlaneseq
      %v174 = vand.u32 %v173, 127
      %vm175 = vcmp.eq.s32.totalorder %v174, 0
      %vm176 = vcmp.eq.s32.totalorder %v174, 1
      %v177 = vstv %s172
      %v178 = vsel %vm176, %v177, 0.0
      %v179 = vstv %s146
      %v180 = vsel %vm175, %v179, %v178
      %181 = vst [vmem:[#allocation8] sm:$0xff] %v180
    $region33: #{tpu_custom_call.1} parent=1 // pred_fallthru
      _
    // Predicated region
    $region34: #{tpu_custom_call.1} parent=1 // pred_check
      _
    $region35: #{tpu_custom_call.1} parent=1 // pred_check_branch
      %183 = sbr.rel (0) target = $region37
    $region36: #{tpu_custom_call.1} parent=1 // pred_region
      %s185 = ssub.s32 128, 128
      %186 = vsyncadd [#allocation5], %s185
      %s188 = sshll.u32 [#allocation8], 4
      %s189 = int_to_ptr.vmem [resolvable:$true] %s188
      %191 = dma.vmem_to_hbm [thread:$0]  %s189, 128, %s4, [#allocation5]
    $region37: #{tpu_custom_call.1} parent=1 // pred_fallthru
      _
    // Predicated region
    $region38: #{tpu_custom_call.1} parent=1 // pred_check
      _
    $region39: #{tpu_custom_call.1} parent=1 // pred_check_branch
      %193 = sbr.rel (0) target = $region41
    $region40: #{tpu_custom_call.1} parent=1 // pred_region
      %194 = dma.done [#allocation5], 128
    $region41: #{tpu_custom_call.1} parent=1 // pred_fallthru
      _
    %195 = vsyncpa [#allocation4], 1
    %196 = vsyncpa [#allocation7], 1
    %197 = vsyncpa [#allocation5], 1

</llo_original>
